<compile_context>
chip_gen: v5e
topology: v5e:2x2
jax: 0.10.0
libtpu: 0.0.40
codegen_flags: <defaults>
</compile_context>

<pallas_src>
import jax
import jax.numpy as jnp
from jax.experimental import pallas as pl
from jax.experimental.pallas import tpu as pltpu

_MARGIN = 1.0
_EPS = 1e-6  # torch.nn.functional.pairwise_distance default eps


def _contrastive_loss_kernel(o1_ref, o2_ref, lab_ref, row_loss_ref, acc_ref):
    # o1/o2: (TB, TK) native dtype, lab: (TB, 1), row_loss: (TB, 1) f32,
    # acc: (TB, 1) f32 scratch carried across the D-reduction axis.
    k = pl.program_id(1)

    @pl.when(k == 0)
    def _init():
        acc_ref[...] = jnp.zeros_like(acc_ref)

    diff = o1_ref[...].astype(jnp.float32) - o2_ref[...].astype(jnp.float32) + _EPS
    acc_ref[...] += jnp.sum(diff * diff, axis=-1, keepdims=True)

    @pl.when(k == pl.num_programs(1) - 1)
    def _finalize():
        d2 = acc_ref[...]                         # squared distance, no re-square
        edist = jnp.sqrt(d2)                      # sqrt only feeds the hinge
        lab = lab_ref[...].astype(jnp.float32)
        hinge = jnp.maximum(_MARGIN - edist, 0.0)
        row_loss_ref[...] = (1.0 - lab) * d2 + lab * (hinge * hinge)


def _cdiv(a, b):
    return (a + b - 1) // b


def _round_up(x, m):
    return ((x + m - 1) // m) * m


def _chip_budgets():
    """(total in-kernel footprint budget, vmem_limit_bytes) per TPU generation."""
    try:
        kind = jax.devices()[0].device_kind.lower()
    except Exception:
        kind = ""
    if "v7" in kind:
        # 64 MiB physical VMEM: bigger tiles (fast HBM) but hard ~48 MiB ceiling.
        return 40 << 20, 48 << 20
    if "v5" in kind and ("lite" in kind or "v5e" in kind):
        # 16 MiB default scoped VMEM; keep footprint modest, raise limit a bit.
        return 12 << 20, 32 << 20
    # v6e / v5p / default: 128 MiB physical VMEM.
    return 24 << 20, 64 << 20


def _choose_tiles(B, D, itemsize, sublane, budget):
    """Pick (tb, tk). tk == D in the common case; tk | D and tk % 128 == 0 otherwise."""
    # Per-step footprint per batch row with full-D blocks:
    #   2 inputs x 2 pipeline buffers x D x itemsize  +  ~2 full-tile f32 temps.
    per_row = D * (4 * itemsize + 8)
    tb = (budget // max(1, per_row)) // sublane * sublane
    if tb >= sublane:
        if B <= sublane:
            return B, D                       # single exact block, no raggedness
        tb = min(tb, _round_up(B, sublane))
        # Keep >= 2 batch blocks for large batches (v7x megacore sharding).
        if B >= 2 * sublane:
            tb = min(tb, _round_up(_cdiv(B, 2), sublane))
        return max(tb, sublane), D

    # Very large D: tile the reduction axis.  tk must be a multiple of 128 and
    # divide D so ragged D-chunks never feed garbage reads into the sum.
    tb = B if B <= sublane else sublane
    per_col = max(1, tb * (4 * itemsize + 8))
    tk_cap = max(128, (budget // per_col) // 128 * 128)
    start = (min(tk_cap, D) // 128) * 128
    for cand in range(start, 127, -128):
        if D % cand == 0:
            return tb, cand
    # TODO(synk): mask ragged D-chunks in-kernel (broadcasted_iota) to support
    # huge D with no 128-multiple divisor; fall back to full rows, min tile.
    return tb, D


def contrastive_loss(out1, out2, label):
    """out1, out2: (B, D); label: (B,). Returns scalar float32 loss."""
    B, D = out1.shape
    itemsize = jnp.dtype(out1.dtype).itemsize
    sublane = {1: 32, 2: 16, 4: 8}.get(itemsize, 8)

    budget, vmem_limit = _chip_budgets()
    tb, tk = _choose_tiles(B, D, itemsize, sublane, budget)

    nb = pl.cdiv(B, tb)
    nk = max(1, D // tk)

    label2d = label.reshape(B, 1).astype(jnp.float32)

    # Deeper input buffering only when per-step DMAs are small and the grid is
    # long enough for it to matter (hides DMA issue latency, costs 1 extra tile).
    per_step_input_bytes = tb * tk * itemsize
    use_deep_buffering = per_step_input_bytes < (512 << 10) and nb * nk >= 4

    def _in_spec():
        if use_deep_buffering:
            return pl.BlockSpec((tb, tk), lambda i, k: (i, k),
                                pipeline_mode=pl.Buffered(3))
        return pl.BlockSpec((tb, tk), lambda i, k: (i, k))

    row_loss = pl.pallas_call(
        _contrastive_loss_kernel,
        out_shape=jax.ShapeDtypeStruct((B, 1), jnp.float32),
        grid_spec=pltpu.PrefetchScalarGridSpec(
            num_scalar_prefetch=0,
            grid=(nb, nk),                    # reduction axis last
            in_specs=[
                _in_spec(),
                _in_spec(),
                pl.BlockSpec((tb, 1), lambda i, k: (i, 0)),
            ],
            out_specs=pl.BlockSpec((tb, 1), lambda i, k: (i, 0)),
            scratch_shapes=[pltpu.VMEM((tb, 1), jnp.float32)],
        ),
        compiler_params=pltpu.CompilerParams(
            dimension_semantics=("parallel", "arbitrary"),
            vmem_limit_bytes=vmem_limit,
        ),
        cost_estimate=pl.CostEstimate(
            flops=5 * B * D + 6 * B,
            transcendentals=B,
            bytes_accessed=2 * B * D * itemsize + 2 * B * 4,  # inputs + label + out
        ),
    )(out1, out2, label2d)

    # Final reduction (negligible traffic): mean over the true batch size.
    return jnp.sum(row_loss[:, 0]) / B


if __name__ == "__main__":
    key = jax.random.PRNGKey(0)
    k1, k2, k3 = jax.random.split(key, 3)

    B, D = 8, 32
    out1 = jax.random.normal(k1, (B, D), dtype=jnp.float32)
    out2 = jax.random.normal(k2, (B, D), dtype=jnp.float32)
    label = jax.random.bernoulli(k3, 0.5, (B,)).astype(jnp.float32)

    loss = contrastive_loss(out1, out2, label)
    jax.block_until_ready(loss)

    # Pure-JAX reference (matches torch pairwise_distance eps quirk + mean).
    edist_ref = jnp.sqrt(jnp.sum((out1 - out2 + _EPS) ** 2, axis=-1))
    ref = jnp.mean(
        (1.0 - label) * edist_ref**2
        + label * jnp.maximum(_MARGIN - edist_ref, 0.0) ** 2
    )
    assert jnp.allclose(loss, ref, rtol=1e-5, atol=1e-6), (loss, ref)

    print("KERNEL_OK")
</pallas_src>

<mosaic_0001>
module attributes {stable_mosaic.version = 11 : i64} {
  func.func @_contrastive_loss_kernel(%arg0: i32, %arg1: i32, %arg2: memref<8x32xf32, #tpu.memory_space<vmem>>, %arg3: memref<8x32xf32, #tpu.memory_space<vmem>>, %arg4: memref<8x1xf32, #tpu.memory_space<vmem>>, %arg5: memref<8x1xf32, #tpu.memory_space<vmem>>, %arg6: memref<8x1xf32, #tpu.memory_space<vmem>>) attributes {dimension_semantics = [#tpu.dimension_semantics<parallel>, #tpu.dimension_semantics<arbitrary>], iteration_bounds = array<i64: 1, 1>, scalar_prefetch = 0 : i64, scratch_operands = 1 : i64, tpu.core_type = #tpu.core_type<tc>, window_params = [{transform_indices = @transform_0, window_bounds = array<i64: 8, 32>}, {transform_indices = @transform_1, window_bounds = array<i64: 8, 32>}, {transform_indices = @transform_2, window_bounds = array<i64: 8, 1>}, {transform_indices = @transform_3, window_bounds = array<i64: 8, 1>}]} {
    %c0_i32 = arith.constant 0 : i32
    %0 = arith.cmpi eq, %arg1, %c0_i32 : i32
    %1 = arith.extui %0 : i1 to i32
    %c0_i32_0 = arith.constant 0 : i32
    %2 = arith.cmpi ne, %1, %c0_i32_0 : i32
    scf.if %2 {
      %cst_11 = arith.constant 0.000000e+00 : f32
      %17 = vector.broadcast %cst_11 : f32 to vector<8x1xf32>
      %c0_12 = arith.constant 0 : index
      %c0_13 = arith.constant 0 : index
      %18 = vector.load %arg6[%c0_12, %c0_13] : memref<8x1xf32, #tpu.memory_space<vmem>>, vector<8x1xf32>
      tpu.vector_store %arg6[%c0_12, %c0_13], %17 {strides = array<i32>} : memref<8x1xf32, #tpu.memory_space<vmem>>, vector<8x1xf32>,
    } else {
    }
    %c0 = arith.constant 0 : index
    %c0_1 = arith.constant 0 : index
    %3 = vector.load %arg2[%c0, %c0_1] : memref<8x32xf32, #tpu.memory_space<vmem>>, vector<8x32xf32>
    %c0_2 = arith.constant 0 : index
    %c0_3 = arith.constant 0 : index
    %4 = vector.load %arg3[%c0_2, %c0_3] : memref<8x32xf32, #tpu.memory_space<vmem>>, vector<8x32xf32>
    %5 = arith.subf %3, %4 : vector<8x32xf32>
    %cst = arith.constant 9.99999997E-7 : f32
    %6 = vector.broadcast %cst : f32 to vector<8x32xf32>
    %7 = arith.addf %5, %6 : vector<8x32xf32>
    %c0_4 = arith.constant 0 : index
    %c0_5 = arith.constant 0 : index
    %8 = vector.load %arg6[%c0_4, %c0_5] : memref<8x1xf32, #tpu.memory_space<vmem>>, vector<8x1xf32>
    %9 = arith.mulf %7, %7 : vector<8x32xf32>
    %cst_6 = arith.constant dense<0.000000e+00> : vector<8xf32>
    %10 = vector.multi_reduction <add>, %9, %cst_6 [1] : vector<8x32xf32> to vector<8xf32>
    %11 = vector.shape_cast %10 : vector<8xf32> to vector<8x1xf32>
    %12 = arith.addf %8, %11 : vector<8x1xf32>
    %c0_7 = arith.constant 0 : index
    %c0_8 = arith.constant 0 : index
    %13 = vector.load %arg6[%c0_7, %c0_8] : memref<8x1xf32, #tpu.memory_space<vmem>>, vector<8x1xf32>
    tpu.vector_store %arg6[%c0_7, %c0_8], %12 {strides = array<i32>} : memref<8x1xf32, #tpu.memory_space<vmem>>, vector<8x1xf32>,
    %c0_i32_9 = arith.constant 0 : i32
    %14 = arith.cmpi eq, %arg1, %c0_i32_9 : i32
    %15 = arith.extui %14 : i1 to i32
    %c0_i32_10 = arith.constant 0 : i32
    %16 = arith.cmpi ne, %15, %c0_i32_10 : i32
    scf.if %16 {
      %c0_11 = arith.constant 0 : index
      %c0_12 = arith.constant 0 : index
      %17 = vector.load %arg6[%c0_11, %c0_12] : memref<8x1xf32, #tpu.memory_space<vmem>>, vector<8x1xf32>
      %18 = math.sqrt %17 : vector<8x1xf32>
      %c0_13 = arith.constant 0 : index
      %c0_14 = arith.constant 0 : index
      %19 = vector.load %arg4[%c0_13, %c0_14] : memref<8x1xf32, #tpu.memory_space<vmem>>, vector<8x1xf32>
      %cst_15 = arith.constant 1.000000e+00 : f32
      %20 = vector.broadcast %cst_15 : f32 to vector<8x1xf32>
      %21 = arith.subf %20, %18 : vector<8x1xf32>
      %cst_16 = arith.constant 0.000000e+00 : f32
      %22 = vector.broadcast %cst_16 : f32 to vector<8x1xf32>
      %23 = arith.maximumf %21, %22 : vector<8x1xf32>
      %cst_17 = arith.constant 1.000000e+00 : f32
      %24 = vector.broadcast %cst_17 : f32 to vector<8x1xf32>
      %25 = arith.subf %24, %19 : vector<8x1xf32>
      %26 = arith.mulf %25, %17 : vector<8x1xf32>
      %27 = arith.mulf %23, %23 : vector<8x1xf32>
      %28 = arith.mulf %19, %27 : vector<8x1xf32>
      %29 = arith.addf %26, %28 : vector<8x1xf32>
      %c0_18 = arith.constant 0 : index
      %c0_19 = arith.constant 0 : index
      %30 = vector.load %arg5[%c0_18, %c0_19] : memref<8x1xf32, #tpu.memory_space<vmem>>, vector<8x1xf32>
      tpu.vector_store %arg5[%c0_18, %c0_19], %29 {strides = array<i32>} : memref<8x1xf32, #tpu.memory_space<vmem>>, vector<8x1xf32>,
    } else {
    }
    return
  }
  func.func @transform_0(%arg0: i32, %arg1: i32) -> (i32, i32) {
    %c0_i32 = arith.constant 0 : i32
    return %arg0, %arg1 : i32, i32
  }
  func.func @transform_1(%arg0: i32, %arg1: i32) -> (i32, i32) {
    %c0_i32 = arith.constant 0 : i32
    return %arg0, %arg1 : i32, i32
  }
  func.func @transform_2(%arg0: i32, %arg1: i32) -> (i32, i32) {
    %c0_i32 = arith.constant 0 : i32
    %c0_i32_0 = arith.constant 0 : i32
    return %arg0, %c0_i32 : i32, i32
  }
  func.func @transform_3(%arg0: i32, %arg1: i32) -> (i32, i32) {
    %c0_i32 = arith.constant 0 : i32
    %c0_i32_0 = arith.constant 0 : i32
    return %arg0, %c0_i32 : i32, i32
  }
}

</mosaic_0001>

<llo_original>
// kernel: tpu_custom_call.1
$region0: #{tpu_custom_call.1}
  #allocation0 [shape = 'u32[]', space=smem, size = 0x4, offset = 0x4, fixed_abs, tag = 'smem constant byte address 0x4 - core index']
  #allocation1 [shape = 'u32[72,128]{1,0:T(1,128)}', space=vmem, size = 0x9000, scoped, tag = 'internal scratch']
  #allocation2 [shape = 'f32[8,1]{1,0:T(8,128)}', space=vmem, size = 0x1000, scoped, tag = 'scratch operand']
  %s0 = inlined_call_operand.vmem [shape: f32[8,32], index: 0, kind: input, shape index: {}]
  %s1 = inlined_call_operand.hbm [shape: f32[8,32], index: 1, kind: input, shape index: {}]
  %s2 = inlined_call_operand.vmem [shape: f32[8,1], index: 2, kind: input, shape index: {}]
  %s3 = inlined_call_operand.vmem [shape: f32[8,1], index: 3, kind: output, shape index: {}]
  %s4 = sld [smem:[#allocation0]]
  $region34: #{tpu_custom_call.1} parent=0
    _
  %s6 = ssub.s32 1, %s4
  %s7 = scalar_select 0, %s6, %s4
  $region1: #{tpu_custom_call.1} parent=0
    #allocation3 [shape = 'u8[4096]{0}', space=vmem, size = 0x1000, scoped, tag = 'input window, operand 1, single buffered']
    #allocation4 [shape = 's32[1]{0}', space=sflag, size = 0x4, scoped, tag = 'scoped memory for tpu_custom_call.1']
    %8 = vsyncpa [#allocation4], 0
    // Predicated region
    $region2: #{tpu_custom_call.1} parent=1 // pred_check
      _
    $region3: #{tpu_custom_call.1} parent=1 // pred_check_branch
      %10 = sbr.rel (0) target = $region5
    $region4: #{tpu_custom_call.1} parent=1 // pred_region
      _
    $region5: #{tpu_custom_call.1} parent=1 // pred_fallthru
      _
    // Predicated region
    $region6: #{tpu_custom_call.1} parent=1 // pred_check
      _
    $region7: #{tpu_custom_call.1} parent=1 // pred_check_branch
      %12 = sbr.rel (0) target = $region9
    $region8: #{tpu_custom_call.1} parent=1 // pred_region
      %14 = vsyncadd [#allocation4], 0
      %s16 = sshll.u32 %s1, 4
      %s17 = int_to_ptr.hbm [resolvable:$true] %s16
      %s18 = sshll.u32 [#allocation3], 4
      %s19 = int_to_ptr.vmem [resolvable:$true] %s18
      %21 = dma.hbm_to_vmem [thread:$0]  %s17, 128, %s19, [#allocation4]
    $region9: #{tpu_custom_call.1} parent=1 // pred_fallthru
      _
    // Predicated region
    $region10: #{tpu_custom_call.1} parent=1 // pred_check
      _
    $region11: #{tpu_custom_call.1} parent=1 // pred_check_branch
      %23 = sbr.rel (0) target = $region13
    $region12: #{tpu_custom_call.1} parent=1 // pred_region
      _
    $region13: #{tpu_custom_call.1} parent=1 // pred_fallthru
      _
    // Predicated region
    $region14: #{tpu_custom_call.1} parent=1 // pred_check
      _
    $region15: #{tpu_custom_call.1} parent=1 // pred_check_branch
      %25 = sbr.rel (0) target = $region17
    $region16: #{tpu_custom_call.1} parent=1 // pred_region
      %27 = dma.done [#allocation4], 128
    $region17: #{tpu_custom_call.1} parent=1 // pred_fallthru
      _
    %p28 = scmp.eq.s32.totalorder 0, 0
    // Predicated region
    $region18: #{tpu_custom_call.1} parent=1 // pred_check
      %p29 = pneg %p28
    $region19: #{tpu_custom_call.1} parent=1 // pred_check_branch
      %31 = sbr.rel (%p29) target = $region21
    $region20: #{tpu_custom_call.1} parent=1 // pred_region
      %vm32 = vcmask 7168
      %33 = vst.msk [vmem:[#allocation2] sm:$0xff] %vm32, 0.0
    $region21: #{tpu_custom_call.1} parent=1 // pred_fallthru
      _
    %v34 = vld [vmem:[%s0] sm:$0xff]
    %v35 = vld [vmem:[#allocation3] sm:$0xff]
    %v36 = vsub.f32 %v34, %v35
    %v37 = vadd.f32 %v36, 1e-06
    %v38 = vld [vmem:[#allocation2] sm:$0xff]
    %v39 = vmul.f32 %v37, %v37
    %vm40 = vcmask 261120
    %v41 = vsel %vm40, %v39, 0.0
    %42 = vadd.xlane.f32.xlu0 %v41
    %v43 = vpop.xlane.xlu0 %42
    %v44 = vadd.f32 %v38, %v43
    %vm45 = vcmask 7168
    %46 = vst.msk [vmem:[#allocation2] sm:$0xff] %vm45, %v44
    // Predicated region
    $region22: #{tpu_custom_call.1} parent=1 // pred_check
      %p47 = pneg %p28
    $region23: #{tpu_custom_call.1} parent=1 // pred_check_branch
      %49 = sbr.rel (%p47) target = $region25
    $region24: #{tpu_custom_call.1} parent=1 // pred_region
      %v50 = vld [vmem:[#allocation2] sm:$0xff]
      %v51 = vrsqrt.pop %v50
      %v52 = vmul.f32 %v51, %v50
      %v53 = vmul.f32 %v52, %v51
      %v54 = vmul.f32 0.5, %v53
      %v55 = vsub.f32 1.5, %v54
      %v56 = vmul.f32 %v51, %v55
      %v57 = vmul.f32 %v50, %v56
      %vm58 = vcmp.eq.f32.partialorder %v50, inf
      %v59 = vsel %vm58, %v50, %v57
      %vm60 = vcmp.eq.f32.partialorder %v50, 0.0
      %v61 = vand.u32 %v50, 2147483648
      %v62 = vsel %vm60, %v61, %v59
      %v63 = vld [vmem:[%s2] sm:$0xff]
      %v64 = vsub.f32 1.0, %v62
      %v65 = vmax.f32 %v64, 0.0
      %v66 = vsub.f32 1.0, %v63
      %v67 = vmul.f32 %v66, %v50
      %v68 = vmul.f32 %v65, %v65
      %v69 = vmul.f32 %v63, %v68
      %v70 = vadd.f32 %v67, %v69
      %71 = vst.msk [vmem:[%s3] sm:$0xff] %vm45, %v70
    $region25: #{tpu_custom_call.1} parent=1 // pred_fallthru
      _
    // Predicated region
    $region26: #{tpu_custom_call.1} parent=1 // pred_check
      _
    $region27: #{tpu_custom_call.1} parent=1 // pred_check_branch
      %73 = sbr.rel (0) target = $region29
    $region28: #{tpu_custom_call.1} parent=1 // pred_region
      _
    $region29: #{tpu_custom_call.1} parent=1 // pred_fallthru
      _
    // Predicated region
    $region30: #{tpu_custom_call.1} parent=1 // pred_check
      _
    $region31: #{tpu_custom_call.1} parent=1 // pred_check_branch
      %75 = sbr.rel (0) target = $region33
    $region32: #{tpu_custom_call.1} parent=1 // pred_region
      _
    $region33: #{tpu_custom_call.1} parent=1 // pred_fallthru
      _
    %76 = vsyncpa [#allocation4], 1

</llo_original>
